<compile_context>
chip_gen: v6e
topology: v6e:2x2x1
jax: 0.10.0
libtpu: 0.0.40
codegen_flags: <defaults>
</compile_context>

<pallas_src>
import functools
import math

import jax
import jax.numpy as jnp
from jax.experimental import pallas as pl
from jax.experimental.pallas import tpu as pltpu

LANES = 1024          # lane-dense slab width (8 vregs wide)
MAX_BLOCK_ROWS = 512  # 512 x 1024 f32 block = 2 MiB -> safe on v5e/v6e/v7x


def _lowbias32(x):
    """Good-avalanche 32-bit integer mixer (lowbias32). x: uint32 array."""
    x = x ^ (x >> jnp.uint32(16))
    x = x * jnp.uint32(0x7FEB352D)
    x = x ^ (x >> jnp.uint32(15))
    x = x * jnp.uint32(0x846CA68B)
    x = x ^ (x >> jnp.uint32(16))
    return x


def _bits_to_unit(bits):
    """uint32 bits -> float32 in [0, 1) using the top 24 bits (exact via int32)."""
    return (bits >> jnp.uint32(8)).astype(jnp.int32).astype(jnp.float32) * jnp.float32(
        1.0 / 16777216.0
    )


def _noise_kernel(seed_ref, x_ref, o_ref, *, sigma):
    r_blk, w = x_ref.shape
    half = w // 2  # Box-Muller produces 2 normals per (u1, u2) pair

    # Unique per-element counter across the whole array (block offset + local).
    base = pl.program_id(0) * (r_blk * w)
    row = jax.lax.broadcasted_iota(jnp.int32, (r_blk, half), 0)
    col = jax.lax.broadcasted_iota(jnp.int32, (r_blk, half), 1)
    idx = (base + row * w + col).astype(jnp.uint32)

    # Two decorrelated streams keyed on the user seed.
    seed = seed_ref[0].astype(jnp.uint32)
    key1 = seed * jnp.uint32(0x9E3779B1) + jnp.uint32(0x7F4A7C15)
    key2 = seed * jnp.uint32(0x85EBCA6B) + jnp.uint32(0x165667B1)
    bits1 = _lowbias32(idx ^ key1)
    bits2 = _lowbias32(idx ^ key2)

    u1 = _bits_to_unit(bits1) + jnp.float32(1.0 / 16777216.0)  # (0, 1], avoids log(0)
    u2 = _bits_to_unit(bits2)                                   # [0, 1)

    # Dual-branch Box-Muller: one (log, sqrt, cos, sin) group -> 2 * half normals.
    r = jnp.sqrt(jnp.float32(-2.0) * jnp.log(u1))
    t = jnp.float32(2.0 * math.pi) * u2
    z = jnp.concatenate([r * jnp.cos(t), r * jnp.sin(t)], axis=-1)  # (r_blk, w)

    # Compute in f32, cast only at the final store (right for bf16 inputs too).
    x = x_ref[...].astype(jnp.float32)
    o_ref[...] = (x + jnp.float32(sigma) * z).astype(o_ref.dtype)


def noise(x, seed, *, sigma=0.1, training=True):
    """Equivalent of Noise.forward: x + N(0, sigma^2) in training, identity in eval."""
    if not training:
        return x

    orig_shape = x.shape
    orig_dtype = x.dtype
    total = x.size

    flat = x.reshape(-1)
    padded_total = pl.cdiv(total, LANES) * LANES
    needs_pad = padded_total != total
    if needs_pad:
        # TODO(synk): mask the ragged tail in-kernel instead of padding/slicing.
        flat = jnp.pad(flat, (0, padded_total - total))

    rows = padded_total // LANES
    x2d = flat.reshape(rows, LANES)

    # Big lane-dense blocks; edge blocks (rows % block_rows != 0) are masked by Pallas.
    block_rows = rows if rows <= MAX_BLOCK_ROWS else MAX_BLOCK_ROWS
    grid = (pl.cdiv(rows, block_rows),)

    seed_arr = jnp.asarray([seed], dtype=jnp.int32)
    kernel = functools.partial(_noise_kernel, sigma=float(sigma))

    out2d = pl.pallas_call(
        kernel,
        out_shape=jax.ShapeDtypeStruct((rows, LANES), orig_dtype),
        grid_spec=pltpu.PrefetchScalarGridSpec(
            num_scalar_prefetch=1,
            grid=grid,
            in_specs=[pl.BlockSpec((block_rows, LANES), lambda i, seed_ref: (i, 0))],
            out_specs=pl.BlockSpec((block_rows, LANES), lambda i, seed_ref: (i, 0)),
        ),
        compiler_params=pltpu.CompilerParams(
            # Blocks are independent (counter-based RNG) -> shard across TCs on v7x.
            dimension_semantics=("parallel",),
        ),
    )(seed_arr, x2d)

    out_flat = out2d.reshape(-1)
    if needs_pad:
        out_flat = out_flat[:total]
    return out_flat.reshape(orig_shape)


if __name__ == "__main__":
    key = jax.random.PRNGKey(0)
    # NCHW input, as in the PyTorch module's typical usage.
    x = jax.random.normal(key, (2, 4, 16, 16), dtype=jnp.float32)

    sigma = 0.1
    y = noise(x, seed=0, sigma=sigma, training=True)
    y = jax.block_until_ready(y)

    # Sanity: shape/dtype preserved, noise magnitude ~ sigma, eval mode is identity.
    assert y.shape == x.shape and y.dtype == x.dtype
    diff = y - x
    assert float(jnp.max(jnp.abs(diff))) > 0.0
    assert abs(float(jnp.std(diff)) - sigma) < 0.05
    y_eval = noise(x, seed=0, sigma=sigma, training=False)
    assert bool(jnp.all(y_eval == x))

    print("KERNEL_OK")
</pallas_src>

<mosaic_0001>
module attributes {stable_mosaic.version = 11 : i64} {
  func.func @_noise_kernel(%arg0: i32, %arg1: memref<1xi32, #tpu.memory_space<smem>>, %arg2: memref<2x1024xf32, #tpu.memory_space<vmem>>, %arg3: memref<2x1024xf32, #tpu.memory_space<vmem>>) attributes {dimension_semantics = [#tpu.dimension_semantics<parallel>], iteration_bounds = array<i64: 1>, scalar_prefetch = 1 : i64, scratch_operands = 0 : i64, tpu.core_type = #tpu.core_type<tc>, window_params = [{transform_indices = @transform_0, window_bounds = array<i64: 2, 1024>}, {transform_indices = @transform_1, window_bounds = array<i64: 2, 1024>}]} {
    %c2048_i32 = arith.constant 2048 : i32
    %0 = arith.muli %arg0, %c2048_i32 : i32
    %1 = tpu.iota {dimensions = array<i32: 0>} : vector<2x512xi32>
    %2 = tpu.iota {dimensions = array<i32: 1>} : vector<2x512xi32>
    %c1024_i32 = arith.constant 1024 : i32
    %3 = vector.broadcast %c1024_i32 : i32 to vector<2x512xi32>
    %4 = arith.muli %1, %3 : vector<2x512xi32>
    %5 = vector.broadcast %0 : i32 to vector<2x512xi32>
    %6 = arith.addi %5, %4 : vector<2x512xi32>
    %7 = arith.addi %6, %2 : vector<2x512xi32>
    %c0 = arith.constant 0 : index
    %8 = memref.load %arg1[%c0] : memref<1xi32, #tpu.memory_space<smem>>
    %c-1640531535_i32 = arith.constant -1640531535 : i32
    %9 = arith.muli %8, %c-1640531535_i32 : i32
    %c2135587861_i32 = arith.constant 2135587861 : i32
    %10 = arith.addi %9, %c2135587861_i32 : i32
    %c-2048144789_i32 = arith.constant -2048144789 : i32
    %11 = arith.muli %8, %c-2048144789_i32 : i32
    %c374761393_i32 = arith.constant 374761393 : i32
    %12 = arith.addi %11, %c374761393_i32 : i32
    %13 = vector.broadcast %10 : i32 to vector<2x512xi32>
    %14 = arith.xori %7, %13 : vector<2x512xi32>
    %c16_i32 = arith.constant 16 : i32
    %15 = vector.broadcast %c16_i32 : i32 to vector<2x512xi32>
    %16 = arith.shrui %14, %15 : vector<2x512xi32>
    %17 = arith.xori %14, %16 : vector<2x512xi32>
    %c2146121005_i32 = arith.constant 2146121005 : i32
    %18 = vector.broadcast %c2146121005_i32 : i32 to vector<2x512xi32>
    %19 = arith.muli %17, %18 : vector<2x512xi32>
    %c15_i32 = arith.constant 15 : i32
    %20 = vector.broadcast %c15_i32 : i32 to vector<2x512xi32>
    %21 = arith.shrui %19, %20 : vector<2x512xi32>
    %22 = arith.xori %19, %21 : vector<2x512xi32>
    %c-2073254261_i32 = arith.constant -2073254261 : i32
    %23 = vector.broadcast %c-2073254261_i32 : i32 to vector<2x512xi32>
    %24 = arith.muli %22, %23 : vector<2x512xi32>
    %c16_i32_0 = arith.constant 16 : i32
    %25 = vector.broadcast %c16_i32_0 : i32 to vector<2x512xi32>
    %26 = arith.shrui %24, %25 : vector<2x512xi32>
    %27 = arith.xori %24, %26 : vector<2x512xi32>
    %28 = vector.broadcast %12 : i32 to vector<2x512xi32>
    %29 = arith.xori %7, %28 : vector<2x512xi32>
    %c16_i32_1 = arith.constant 16 : i32
    %30 = vector.broadcast %c16_i32_1 : i32 to vector<2x512xi32>
    %31 = arith.shrui %29, %30 : vector<2x512xi32>
    %32 = arith.xori %29, %31 : vector<2x512xi32>
    %c2146121005_i32_2 = arith.constant 2146121005 : i32
    %33 = vector.broadcast %c2146121005_i32_2 : i32 to vector<2x512xi32>
    %34 = arith.muli %32, %33 : vector<2x512xi32>
    %c15_i32_3 = arith.constant 15 : i32
    %35 = vector.broadcast %c15_i32_3 : i32 to vector<2x512xi32>
    %36 = arith.shrui %34, %35 : vector<2x512xi32>
    %37 = arith.xori %34, %36 : vector<2x512xi32>
    %c-2073254261_i32_4 = arith.constant -2073254261 : i32
    %38 = vector.broadcast %c-2073254261_i32_4 : i32 to vector<2x512xi32>
    %39 = arith.muli %37, %38 : vector<2x512xi32>
    %c16_i32_5 = arith.constant 16 : i32
    %40 = vector.broadcast %c16_i32_5 : i32 to vector<2x512xi32>
    %41 = arith.shrui %39, %40 : vector<2x512xi32>
    %42 = arith.xori %39, %41 : vector<2x512xi32>
    %c8_i32 = arith.constant 8 : i32
    %43 = vector.broadcast %c8_i32 : i32 to vector<2x512xi32>
    %44 = arith.shrui %27, %43 : vector<2x512xi32>
    %45 = arith.sitofp %44 : vector<2x512xi32> to vector<2x512xf32>
    %cst = arith.constant 5.96046448E-8 : f32
    %46 = vector.broadcast %cst : f32 to vector<2x512xf32>
    %47 = arith.mulf %45, %46 : vector<2x512xf32>
    %cst_6 = arith.constant 5.96046448E-8 : f32
    %48 = vector.broadcast %cst_6 : f32 to vector<2x512xf32>
    %49 = arith.addf %47, %48 : vector<2x512xf32>
    %c8_i32_7 = arith.constant 8 : i32
    %50 = vector.broadcast %c8_i32_7 : i32 to vector<2x512xi32>
    %51 = arith.shrui %42, %50 : vector<2x512xi32>
    %52 = arith.sitofp %51 : vector<2x512xi32> to vector<2x512xf32>
    %cst_8 = arith.constant 5.96046448E-8 : f32
    %53 = vector.broadcast %cst_8 : f32 to vector<2x512xf32>
    %54 = arith.mulf %52, %53 : vector<2x512xf32>
    %55 = math.log %49 : vector<2x512xf32>
    %cst_9 = arith.constant -2.000000e+00 : f32
    %56 = vector.broadcast %cst_9 : f32 to vector<2x512xf32>
    %57 = arith.mulf %56, %55 : vector<2x512xf32>
    %58 = math.sqrt %57 : vector<2x512xf32>
    %cst_10 = arith.constant 6.28318548 : f32
    %59 = vector.broadcast %cst_10 : f32 to vector<2x512xf32>
    %60 = arith.mulf %59, %54 : vector<2x512xf32>
    %61 = math.cos %60 : vector<2x512xf32>
    %62 = arith.mulf %58, %61 : vector<2x512xf32>
    %63 = math.sin %60 : vector<2x512xf32>
    %64 = arith.mulf %58, %63 : vector<2x512xf32>
    %65 = tpu.concatenate %62, %64 in 1 : vector<2x512xf32>, vector<2x512xf32> -> vector<2x1024xf32>
    %c0_11 = arith.constant 0 : index
    %c0_12 = arith.constant 0 : index
    %66 = vector.load %arg2[%c0_11, %c0_12] : memref<2x1024xf32, #tpu.memory_space<vmem>>, vector<2x1024xf32>
    %cst_13 = arith.constant 1.000000e-01 : f32
    %67 = vector.broadcast %cst_13 : f32 to vector<2x1024xf32>
    %68 = arith.mulf %67, %65 : vector<2x1024xf32>
    %69 = arith.addf %66, %68 : vector<2x1024xf32>
    %c0_14 = arith.constant 0 : index
    %c0_15 = arith.constant 0 : index
    %70 = vector.load %arg3[%c0_14, %c0_15] : memref<2x1024xf32, #tpu.memory_space<vmem>>, vector<2x1024xf32>
    tpu.vector_store %arg3[%c0_14, %c0_15], %69 {strides = array<i32>} : memref<2x1024xf32, #tpu.memory_space<vmem>>, vector<2x1024xf32>,
    return
  }
  func.func @transform_0(%arg0: i32, %arg1: memref<1xi32, #tpu.memory_space<smem>>) -> (i32, i32) {
    %c0_i32 = arith.constant 0 : i32
    %c0_i32_0 = arith.constant 0 : i32
    return %arg0, %c0_i32 : i32, i32
  }
  func.func @transform_1(%arg0: i32, %arg1: memref<1xi32, #tpu.memory_space<smem>>) -> (i32, i32) {
    %c0_i32 = arith.constant 0 : i32
    %c0_i32_0 = arith.constant 0 : i32
    return %arg0, %c0_i32 : i32, i32
  }
}

</mosaic_0001>

<llo_original>
// kernel: tpu_custom_call.1
$region0: #{tpu_custom_call.1}
  #allocation0 [shape = 'u32[]', space=smem, size = 0x4, offset = 0x4, fixed_abs, tag = 'smem constant byte address 0x4 - core index']
  #allocation1 [shape = 'u32[144,128]{1,0:T(1,128)}', space=vmem, size = 0x12000, scoped, tag = 'internal scratch']
  #allocation2 [shape = 's32[1]{0}', space=sflag, size = 0x4, scoped, tag = 'scoped memory for tpu_custom_call.1']
  #allocation3 [shape = 's32[1]{0:T(128)S(6)}', space=smem, size = 0x200, scoped, tag = 'prefetched SMEM operand 0']
  %s0 = inlined_call_operand.<no memory space> [shape: s32[1], index: 0, kind: input, shape index: {}]
  %s1 = inlined_call_operand.hbm [shape: f32[2,1024], index: 1, kind: input, shape index: {}]
  %s2 = inlined_call_operand.hbm [shape: f32[2,1024], index: 2, kind: output, shape index: {}]
  %s3 = sld [smem:[#allocation0]]
  $region18: #{tpu_custom_call.1} parent=0
    _
  %s5 = ssub.s32 1, %s3
  %s6 = scalar_select 0, %s5, %s3
  %7 = sst [smem:[#allocation3]] %s0
  $region1: #{tpu_custom_call.1} parent=0
    #allocation4 [shape = 'u8[8192]{0}', space=vmem, size = 0x2000, scoped, tag = 'input window, operand 1, single buffered']
    #allocation5 [shape = 's32[1]{0}', space=sflag, size = 0x4, scoped, tag = 'scoped memory for tpu_custom_call.1']
    #allocation6 [shape = 's32[1]{0}', space=sflag, size = 0x4, scoped, tag = 'scoped memory for tpu_custom_call.1']
    #allocation7 [shape = 'u8[8192]{0}', space=vmem, size = 0x2000, scoped, tag = 'output window, operand 0, single buffered']
    %8 = vsyncpa [#allocation5], 0
    %9 = vsyncpa [#allocation6], 0
    // Predicated region
    $region2: #{tpu_custom_call.1} parent=1 // pred_check
      _
    $region3: #{tpu_custom_call.1} parent=1 // pred_check_branch
      %11 = sbr.rel (0) target = $region5
    $region4: #{tpu_custom_call.1} parent=1 // pred_region
      %s13 = ssub.s32 256, 256
      %14 = vsyncadd [#allocation5], %s13
      %s16 = sshll.u32 [#allocation4], 4
      %s17 = int_to_ptr.vmem [resolvable:$true] %s16
      %19 = dma.hbm_to_vmem [thread:$0]  %s1, 256, %s17, [#allocation5]
    $region5: #{tpu_custom_call.1} parent=1 // pred_fallthru
      _
    // Predicated region
    $region6: #{tpu_custom_call.1} parent=1 // pred_check
      _
    $region7: #{tpu_custom_call.1} parent=1 // pred_check_branch
      %21 = sbr.rel (0) target = $region9
    $region8: #{tpu_custom_call.1} parent=1 // pred_region
      %22 = dma.done [#allocation5], 256
    $region9: #{tpu_custom_call.1} parent=1 // pred_fallthru
      _
    %s23 = smul.u32 0, 2048
    %v24 = vlaneseq
    %v25 = vshrl.u32 %v24, 7
    %v26 = vlaneseq
    %v27 = vand.u32 %v26, 127
    %v28 = vadd.s32 %v27, 128
    %v29 = vadd.s32 %v27, 256
    %v30 = vadd.s32 %v27, 384
    %v31 = vmul.u32 %v25, 1024
    %v32 = vstv %s23
    %v33 = vadd.s32 %v32, %v31
    %v34 = vadd.s32 %v33, %v27
    %v35 = vadd.s32 %v33, %v28
    %v36 = vadd.s32 %v33, %v29
    %v37 = vadd.s32 %v33, %v30
    %s38 = sld [smem:[#allocation3]]
    %s39 = smul.u32 %s38, 2654435761
    %s40 = sadd.s32 %s39, 2135587861
    %s41 = smul.u32 %s38, 2246822507
    %s42 = sadd.s32 %s41, 374761393
    %v43 = vstv %s40
    %v44 = vxor.u32 %v34, %v43
    %v45 = vxor.u32 %v35, %v43
    %v46 = vxor.u32 %v36, %v43
    %v47 = vxor.u32 %v37, %v43
    %v48 = vshrl.u32 %v44, 16
    %v49 = vshrl.u32 %v45, 16
    %v50 = vshrl.u32 %v46, 16
    %v51 = vshrl.u32 %v47, 16
    %v52 = vxor.u32 %v44, %v48
    %v53 = vxor.u32 %v45, %v49
    %v54 = vxor.u32 %v46, %v50
    %v55 = vxor.u32 %v47, %v51
    %v56 = vmul.u32 %v52, 2146121005
    %v57 = vmul.u32 %v53, 2146121005
    %v58 = vmul.u32 %v54, 2146121005
    %v59 = vmul.u32 %v55, 2146121005
    %v60 = vshrl.u32 %v56, 15
    %v61 = vshrl.u32 %v57, 15
    %v62 = vshrl.u32 %v58, 15
    %v63 = vshrl.u32 %v59, 15
    %v64 = vxor.u32 %v56, %v60
    %v65 = vxor.u32 %v57, %v61
    %v66 = vxor.u32 %v58, %v62
    %v67 = vxor.u32 %v59, %v63
    %v68 = vmul.u32 %v64, 2221713035
    %v69 = vmul.u32 %v65, 2221713035
    %v70 = vmul.u32 %v66, 2221713035
    %v71 = vmul.u32 %v67, 2221713035
    %v72 = vshrl.u32 %v68, 16
    %v73 = vshrl.u32 %v69, 16
    %v74 = vshrl.u32 %v70, 16
    %v75 = vshrl.u32 %v71, 16
    %v76 = vxor.u32 %v68, %v72
    %v77 = vxor.u32 %v69, %v73
    %v78 = vxor.u32 %v70, %v74
    %v79 = vxor.u32 %v71, %v75
    %v80 = vstv %s42
    %v81 = vxor.u32 %v34, %v80
    %v82 = vxor.u32 %v35, %v80
    %v83 = vxor.u32 %v36, %v80
    %v84 = vxor.u32 %v37, %v80
    %v85 = vshrl.u32 %v81, 16
    %v86 = vshrl.u32 %v82, 16
    %v87 = vshrl.u32 %v83, 16
    %v88 = vshrl.u32 %v84, 16
    %v89 = vxor.u32 %v81, %v85
    %v90 = vxor.u32 %v82, %v86
    %v91 = vxor.u32 %v83, %v87
    %v92 = vxor.u32 %v84, %v88
    %v93 = vmul.u32 %v89, 2146121005
    %v94 = vmul.u32 %v90, 2146121005
    %v95 = vmul.u32 %v91, 2146121005
    %v96 = vmul.u32 %v92, 2146121005
    %v97 = vshrl.u32 %v93, 15
    %v98 = vshrl.u32 %v94, 15
    %v99 = vshrl.u32 %v95, 15
    %v100 = vshrl.u32 %v96, 15
    %v101 = vxor.u32 %v93, %v97
    %v102 = vxor.u32 %v94, %v98
    %v103 = vxor.u32 %v95, %v99
    %v104 = vxor.u32 %v96, %v100
    %v105 = vmul.u32 %v101, 2221713035
    %v106 = vmul.u32 %v102, 2221713035
    %v107 = vmul.u32 %v103, 2221713035
    %v108 = vmul.u32 %v104, 2221713035
    %v109 = vshrl.u32 %v105, 16
    %v110 = vshrl.u32 %v106, 16
    %v111 = vshrl.u32 %v107, 16
    %v112 = vshrl.u32 %v108, 16
    %v113 = vxor.u32 %v105, %v109
    %v114 = vxor.u32 %v106, %v110
    %v115 = vxor.u32 %v107, %v111
    %v116 = vxor.u32 %v108, %v112
    %v117 = vshrl.u32 %v76, 8
    %v118 = vshrl.u32 %v77, 8
    %v119 = vshrl.u32 %v78, 8
    %v120 = vshrl.u32 %v79, 8
    %v121 = vcvt.s32.f32 %v117
    %v122 = vcvt.s32.f32 %v118
    %v123 = vcvt.s32.f32 %v119
    %v124 = vcvt.s32.f32 %v120
    %v125 = vmul.f32 %v121, 5.9604645e-08
    %v126 = vmul.f32 %v122, 5.9604645e-08
    %v127 = vmul.f32 %v123, 5.9604645e-08
    %v128 = vmul.f32 %v124, 5.9604645e-08
    %v129 = vadd.f32 %v125, 5.9604645e-08
    %v130 = vadd.f32 %v126, 5.9604645e-08
    %v131 = vadd.f32 %v127, 5.9604645e-08
    %v132 = vadd.f32 %v128, 5.9604645e-08
    %v133 = vshrl.u32 %v113, 8
    %v134 = vshrl.u32 %v114, 8
    %v135 = vshrl.u32 %v115, 8
    %v136 = vshrl.u32 %v116, 8
    %v137 = vcvt.s32.f32 %v133
    %v138 = vcvt.s32.f32 %v134
    %v139 = vcvt.s32.f32 %v135
    %v140 = vcvt.s32.f32 %v136
    %v141 = vmul.f32 %v137, 5.9604645e-08
    %v142 = vmul.f32 %v138, 5.9604645e-08
    %v143 = vmul.f32 %v139, 5.9604645e-08
    %v144 = vmul.f32 %v140, 5.9604645e-08
    %v145 = vlog2.pop %v129
    %v146 = vmul.f32 %v145, 0.6931472
    %v147 = vlog2.pop %v130
    %v148 = vmul.f32 %v147, 0.6931472
    %v149 = vlog2.pop %v131
    %v150 = vmul.f32 %v149, 0.6931472
    %v151 = vlog2.pop %v132
    %v152 = vmul.f32 %v151, 0.6931472
    %v153 = vmul.f32 %v146, -2.0
    %v154 = vmul.f32 %v148, -2.0
    %v155 = vmul.f32 %v150, -2.0
    %v156 = vmul.f32 %v152, -2.0
    %v157 = vrsqrt.pop %v153
    %v158 = vmul.f32 %v153, %v157
    %vm159 = vcmp.eq.f32.partialorder %v153, inf
    %v160 = vsel %vm159, %v153, %v158
    %vm161 = vcmp.eq.f32.partialorder %v153, 0.0
    %v162 = vand.u32 %v153, 2147483648
    %v163 = vsel %vm161, %v162, %v160
    %v164 = vrsqrt.pop %v154
    %v165 = vmul.f32 %v154, %v164
    %vm166 = vcmp.eq.f32.partialorder %v154, inf
    %v167 = vsel %vm166, %v154, %v165
    %vm168 = vcmp.eq.f32.partialorder %v154, 0.0
    %v169 = vand.u32 %v154, 2147483648
    %v170 = vsel %vm168, %v169, %v167
    %v171 = vrsqrt.pop %v155
    %v172 = vmul.f32 %v155, %v171
    %vm173 = vcmp.eq.f32.partialorder %v155, inf
    %v174 = vsel %vm173, %v155, %v172
    %vm175 = vcmp.eq.f32.partialorder %v155, 0.0
    %v176 = vand.u32 %v155, 2147483648
    %v177 = vsel %vm175, %v176, %v174
    %v178 = vrsqrt.pop %v156
    %v179 = vmul.f32 %v156, %v178
    %vm180 = vcmp.eq.f32.partialorder %v156, inf
    %v181 = vsel %vm180, %v156, %v179
    %vm182 = vcmp.eq.f32.partialorder %v156, 0.0
    %v183 = vand.u32 %v156, 2147483648
    %v184 = vsel %vm182, %v183, %v181
    %v185 = vmul.f32 %v141, 6.2831855
    %v186 = vmul.f32 %v142, 6.2831855
    %v187 = vmul.f32 %v143, 6.2831855
    %v188 = vmul.f32 %v144, 6.2831855
    %v189 = vand.u32 2147483647, %v185
    %vm190 = vcmp.le.f32.partialorder %v189, 0.7853982
    %vm191 = vcmp.lt.s32.totalorder %v185, 0
    %v192 = vand.u32 %v185, 2139095040
    %v193 = vshrl.u32 %v192, 23
    %v194 = vsub.s32 %v193, 127
    %v195 = vand.u32 2147483647, %v185
    %v196 = vand.u32 %v195, 8388607
    %v197 = vor.u32 %v196, 8388608
    %v198 = vsub.s32 0, %v197
    %v199 = vadd.s32 %v194, 1
    %vm200 = vcmp.gt.s32.totalorder %v199, 0
    %v201 = vsel %vm200, %v199, 0
    %v202 = vshrl.u32 %v201, 5
    %v203 = vand.u32 %v201, 31
    %v204 = vsub.s32 32, %v203
    %v205 = vshrl.u32 683565275, %v204
    %v206 = vshll.u32 683565275, %v203
    %v207 = vshrl.u32 2475754826, %v204
    %v208 = vor.u32 %v206, %v207
    %v209 = vshll.u32 2475754826, %v203
    %v210 = vshrl.u32 2131351028, %v204
    %v211 = vor.u32 %v209, %v210
    %v212 = vshll.u32 2131351028, %v203
    %v213 = vshrl.u32 2102212464, %v204
    %v214 = vor.u32 %v212, %v213
    %v215 = vshll.u32 2102212464, %v203
    %v216 = vshrl.u32 920167782, %v204
    %v217 = vor.u32 %v215, %v216
    %v218 = vshll.u32 920167782, %v203
    %v219 = vshrl.u32 1326507024, %v204
    %v220 = vor.u32 %v218, %v219
    %vm221 = vcmp.lt.s32.totalorder %v202, 1
    %vm222 = vcmp.lt.s32.totalorder %v202, 2
    %vm223 = vcmp.lt.s32.totalorder %v202, 3
    %vm224 = vcmp.lt.s32.totalorder %v202, 4
    %v225 = vsel %vm221, %v205, %v208
    %v226 = vsel %vm224, %v214, 2102212464
    %v227 = vsel %vm223, %v211, %v226
    %v228 = vsel %vm222, %v225, %v227
    %v229 = vsel %vm221, %v208, %v211
    %v230 = vsel %vm224, %v217, 920167782
    %v231 = vsel %vm223, %v214, %v230
    %v232 = vsel %vm222, %v229, %v231
    %v233 = vsel %vm221, %v211, %v214
    %v234 = vsel %vm224, %v220, 1326507024
    %v235 = vsel %vm223, %v217, %v234
    %v236 = vsel %vm222, %v233, %v235
    %v237 = vshll.u32 %v197, 8
    %v238 = vmul.u32.u64.compose %v237, %v236
    %v239 = vextract.low.u32 %v238
    %v240 = vextract.high.u32 %v238
    %v241 = vmul.u32.u64.compose %v237, %v232
    %v242 = vextract.low.u32 %v241
    %v243 = vextract.high.u32 %v241
    %v244 = vmul.u32 %v237, %v228
    %v245 = vadd.s32 %v240, %v242
    %vm246 = vc.u32 %v240, %v242
    %v247 = vadd.s32 %v243, 1
    %v248 = vsel %vm246, %v247, %v243
    %v249 = vadd.s32 %v244, %v248
    %v250 = vadd.s32 %v249, 536870912
    %v251 = vshrl.u32 %v250, 30
    %v252 = vshll.u32 %v251, 30
    %v253 = vsub.s32 %v249, %v252
    %vm254 = vcmp.lt.s32.totalorder %v253, 0
    %v255 = vsub.s32 0, %v253
    %v256 = vsel %vm254, %v255, %v253
    %v257 = vclz %v256
    %v258 = vsub.s32 %v257, 2
    %vm259 = vcmp.gt.s32.totalorder 0, %v258
    %v260 = vsel %vm259, 0, %v258
    %v261 = vsub.s32 32, %v260
    %v262 = vshll.u32 %v253, %v260
    %v263 = vshrl.u32 %v245, %v261
    %v264 = vor.u32 %v262, %v263
    %v265 = vsub.s32 4294967266, %v260
    %v266 = vadd.s32 %v265, 127
    %v267 = vshll.u32 %v266, 23
    %v268 = vor.u32 4788187, %v267
    %v269 = vand.u32 2147483647, %v268
    %v271 = vcvt.s32.f32 %v264
    %v272 = vmul.f32 %v271, %v269
    %v273 = vxor.u32 %v272, 2147483648
    %v274 = vsel %vm191, %v273, %v272
    %v275 = vsub.s32 4, %v251
    %v276 = vsel %vm191, %v275, %v251
    %v277 = vsel %vm190, %v185, %v274
    %v278 = vsel %vm190, 0, %v276
    %v279 = vcosq.f32.pop %v277
    %v280 = vsinq.f32.pop %v277
    %vm281 = vweird.f32 %v185
    %v282 = vand.u32 %v278, 3
    %vm283 = vcmp.lt.s32.totalorder %v282, 2
    %vm284 = vcmp.eq.s32.totalorder %v282, 0
    %v285 = vxor.u32 %v280, 2147483648
    %v286 = vsel %vm284, %v279, %v285
    %vm287 = vcmp.eq.s32.totalorder %v282, 2
    %v288 = vxor.u32 %v279, 2147483648
    %v289 = vsel %vm287, %v288, %v280
    %v290 = vsel %vm283, %v286, %v289
    %v291 = vsel %vm281, nan, %v290
    %v292 = vand.u32 2147483647, %v186
    %vm293 = vcmp.le.f32.partialorder %v292, 0.7853982
    %vm294 = vcmp.lt.s32.totalorder %v186, 0
    %v295 = vand.u32 %v186, 2139095040
    %v296 = vshrl.u32 %v295, 23
    %v297 = vsub.s32 %v296, 127
    %v298 = vand.u32 2147483647, %v186
    %v299 = vand.u32 %v298, 8388607
    %v300 = vor.u32 %v299, 8388608
    %v301 = vsub.s32 0, %v300
    %v302 = vadd.s32 %v297, 1
    %vm303 = vcmp.gt.s32.totalorder %v302, 0
    %v304 = vsel %vm303, %v302, 0
    %v305 = vshrl.u32 %v304, 5
    %v306 = vand.u32 %v304, 31
    %v307 = vsub.s32 32, %v306
    %v308 = vshrl.u32 683565275, %v307
    %v309 = vshll.u32 683565275, %v306
    %v310 = vshrl.u32 2475754826, %v307
    %v311 = vor.u32 %v309, %v310
    %v312 = vshll.u32 2475754826, %v306
    %v313 = vshrl.u32 2131351028, %v307
    %v314 = vor.u32 %v312, %v313
    %v315 = vshll.u32 2131351028, %v306
    %v316 = vshrl.u32 2102212464, %v307
    %v317 = vor.u32 %v315, %v316
    %v318 = vshll.u32 2102212464, %v306
    %v319 = vshrl.u32 920167782, %v307
    %v320 = vor.u32 %v318, %v319
    %v321 = vshll.u32 920167782, %v306
    %v322 = vshrl.u32 1326507024, %v307
    %v323 = vor.u32 %v321, %v322
    %vm324 = vcmp.lt.s32.totalorder %v305, 1
    %vm325 = vcmp.lt.s32.totalorder %v305, 2
    %vm326 = vcmp.lt.s32.totalorder %v305, 3
    %vm327 = vcmp.lt.s32.totalorder %v305, 4
    %v328 = vsel %vm324, %v308, %v311
    %v329 = vsel %vm327, %v317, 2102212464
    %v330 = vsel %vm326, %v314, %v329
    %v331 = vsel %vm325, %v328, %v330
    %v332 = vsel %vm324, %v311, %v314
    %v333 = vsel %vm327, %v320, 920167782
    %v334 = vsel %vm326, %v317, %v333
    %v335 = vsel %vm325, %v332, %v334
    %v336 = vsel %vm324, %v314, %v317
    %v337 = vsel %vm327, %v323, 1326507024
    %v338 = vsel %vm326, %v320, %v337
    %v339 = vsel %vm325, %v336, %v338
    %v340 = vshll.u32 %v300, 8
    %v341 = vmul.u32.u64.compose %v340, %v339
    %v342 = vextract.low.u32 %v341
    %v343 = vextract.high.u32 %v341
    %v344 = vmul.u32.u64.compose %v340, %v335
    %v345 = vextract.low.u32 %v344
    %v346 = vextract.high.u32 %v344
    %v347 = vmul.u32 %v340, %v331
    %v348 = vadd.s32 %v343, %v345
    %vm349 = vc.u32 %v343, %v345
    %v350 = vadd.s32 %v346, 1
    %v351 = vsel %vm349, %v350, %v346
    %v352 = vadd.s32 %v347, %v351
    %v353 = vadd.s32 %v352, 536870912
    %v354 = vshrl.u32 %v353, 30
    %v355 = vshll.u32 %v354, 30
    %v356 = vsub.s32 %v352, %v355
    %vm357 = vcmp.lt.s32.totalorder %v356, 0
    %v358 = vsub.s32 0, %v356
    %v359 = vsel %vm357, %v358, %v356
    %v360 = vclz %v359
    %v361 = vsub.s32 %v360, 2
    %vm362 = vcmp.gt.s32.totalorder 0, %v361
    %v363 = vsel %vm362, 0, %v361
    %v364 = vsub.s32 32, %v363
    %v365 = vshll.u32 %v356, %v363
    %v366 = vshrl.u32 %v348, %v364
    %v367 = vor.u32 %v365, %v366
    %v368 = vsub.s32 4294967266, %v363
    %v369 = vadd.s32 %v368, 127
    %v370 = vshll.u32 %v369, 23
    %v371 = vor.u32 4788187, %v370
    %v372 = vand.u32 2147483647, %v371
    %v374 = vcvt.s32.f32 %v367
    %v375 = vmul.f32 %v374, %v372
    %v376 = vxor.u32 %v375, 2147483648
    %v377 = vsel %vm294, %v376, %v375
    %v378 = vsub.s32 4, %v354
    %v379 = vsel %vm294, %v378, %v354
    %v380 = vsel %vm293, %v186, %v377
    %v381 = vsel %vm293, 0, %v379
    %v382 = vcosq.f32.pop %v380
    %v383 = vsinq.f32.pop %v380
    %vm384 = vweird.f32 %v186
    %v385 = vand.u32 %v381, 3
    %vm386 = vcmp.lt.s32.totalorder %v385, 2
    %vm387 = vcmp.eq.s32.totalorder %v385, 0
    %v388 = vxor.u32 %v383, 2147483648
    %v389 = vsel %vm387, %v382, %v388
    %vm390 = vcmp.eq.s32.totalorder %v385, 2
    %v391 = vxor.u32 %v382, 2147483648
    %v392 = vsel %vm390, %v391, %v383
    %v393 = vsel %vm386, %v389, %v392
    %v394 = vsel %vm384, nan, %v393
    %v395 = vand.u32 2147483647, %v187
    %vm396 = vcmp.le.f32.partialorder %v395, 0.7853982
    %vm397 = vcmp.lt.s32.totalorder %v187, 0
    %v398 = vand.u32 %v187, 2139095040
    %v399 = vshrl.u32 %v398, 23
    %v400 = vsub.s32 %v399, 127
    %v401 = vand.u32 2147483647, %v187
    %v402 = vand.u32 %v401, 8388607
    %v403 = vor.u32 %v402, 8388608
    %v404 = vsub.s32 0, %v403
    %v405 = vadd.s32 %v400, 1
    %vm406 = vcmp.gt.s32.totalorder %v405, 0
    %v407 = vsel %vm406, %v405, 0
    %v408 = vshrl.u32 %v407, 5
    %v409 = vand.u32 %v407, 31
    %v410 = vsub.s32 32, %v409
    %v411 = vshrl.u32 683565275, %v410
    %v412 = vshll.u32 683565275, %v409
    %v413 = vshrl.u32 2475754826, %v410
    %v414 = vor.u32 %v412, %v413
    %v415 = vshll.u32 2475754826, %v409
    %v416 = vshrl.u32 2131351028, %v410
    %v417 = vor.u32 %v415, %v416
    %v418 = vshll.u32 2131351028, %v409
    %v419 = vshrl.u32 2102212464, %v410
    %v420 = vor.u32 %v418, %v419
    %v421 = vshll.u32 2102212464, %v409
    %v422 = vshrl.u32 920167782, %v410
    %v423 = vor.u32 %v421, %v422
    %v424 = vshll.u32 920167782, %v409
    %v425 = vshrl.u32 1326507024, %v410
    %v426 = vor.u32 %v424, %v425
    %vm427 = vcmp.lt.s32.totalorder %v408, 1
    %vm428 = vcmp.lt.s32.totalorder %v408, 2
    %vm429 = vcmp.lt.s32.totalorder %v408, 3
    %vm430 = vcmp.lt.s32.totalorder %v408, 4
    %v431 = vsel %vm427, %v411, %v414
    %v432 = vsel %vm430, %v420, 2102212464
    %v433 = vsel %vm429, %v417, %v432
    %v434 = vsel %vm428, %v431, %v433
    %v435 = vsel %vm427, %v414, %v417
    %v436 = vsel %vm430, %v423, 920167782
    %v437 = vsel %vm429, %v420, %v436
    %v438 = vsel %vm428, %v435, %v437
    %v439 = vsel %vm427, %v417, %v420
    %v440 = vsel %vm430, %v426, 1326507024
    %v441 = vsel %vm429, %v423, %v440
    %v442 = vsel %vm428, %v439, %v441
    %v443 = vshll.u32 %v403, 8
    %v444 = vmul.u32.u64.compose %v443, %v442
    %v445 = vextract.low.u32 %v444
    %v446 = vextract.high.u32 %v444
    %v447 = vmul.u32.u64.compose %v443, %v438
    %v448 = vextract.low.u32 %v447
    %v449 = vextract.high.u32 %v447
    %v450 = vmul.u32 %v443, %v434
    %v451 = vadd.s32 %v446, %v448
    %vm452 = vc.u32 %v446, %v448
    %v453 = vadd.s32 %v449, 1
    %v454 = vsel %vm452, %v453, %v449
    %v455 = vadd.s32 %v450, %v454
    %v456 = vadd.s32 %v455, 536870912
    %v457 = vshrl.u32 %v456, 30
    %v458 = vshll.u32 %v457, 30
    %v459 = vsub.s32 %v455, %v458
    %vm460 = vcmp.lt.s32.totalorder %v459, 0
    %v461 = vsub.s32 0, %v459
    %v462 = vsel %vm460, %v461, %v459
    %v463 = vclz %v462
    %v464 = vsub.s32 %v463, 2
    %vm465 = vcmp.gt.s32.totalorder 0, %v464
    %v466 = vsel %vm465, 0, %v464
    %v467 = vsub.s32 32, %v466
    %v468 = vshll.u32 %v459, %v466
    %v469 = vshrl.u32 %v451, %v467
    %v470 = vor.u32 %v468, %v469
    %v471 = vsub.s32 4294967266, %v466
    %v472 = vadd.s32 %v471, 127
    %v473 = vshll.u32 %v472, 23
    %v474 = vor.u32 4788187, %v473
    %v475 = vand.u32 2147483647, %v474
    %v477 = vcvt.s32.f32 %v470
    %v478 = vmul.f32 %v477, %v475
    %v479 = vxor.u32 %v478, 2147483648
    %v480 = vsel %vm397, %v479, %v478
    %v481 = vsub.s32 4, %v457
    %v482 = vsel %vm397, %v481, %v457
    %v483 = vsel %vm396, %v187, %v480
    %v484 = vsel %vm396, 0, %v482
    %v485 = vcosq.f32.pop %v483
    %v486 = vsinq.f32.pop %v483
    %vm487 = vweird.f32 %v187
    %v488 = vand.u32 %v484, 3
    %vm489 = vcmp.lt.s32.totalorder %v488, 2
    %vm490 = vcmp.eq.s32.totalorder %v488, 0
    %v491 = vxor.u32 %v486, 2147483648
    %v492 = vsel %vm490, %v485, %v491
    %vm493 = vcmp.eq.s32.totalorder %v488, 2
    %v494 = vxor.u32 %v485, 2147483648
    %v495 = vsel %vm493, %v494, %v486
    %v496 = vsel %vm489, %v492, %v495
    %v497 = vsel %vm487, nan, %v496
    %v498 = vand.u32 2147483647, %v188
    %vm499 = vcmp.le.f32.partialorder %v498, 0.7853982
    %vm500 = vcmp.lt.s32.totalorder %v188, 0
    %v501 = vand.u32 %v188, 2139095040
    %v502 = vshrl.u32 %v501, 23
    %v503 = vsub.s32 %v502, 127
    %v504 = vand.u32 2147483647, %v188
    %v505 = vand.u32 %v504, 8388607
    %v506 = vor.u32 %v505, 8388608
    %v507 = vsub.s32 0, %v506
    %v508 = vadd.s32 %v503, 1
    %vm509 = vcmp.gt.s32.totalorder %v508, 0
    %v510 = vsel %vm509, %v508, 0
    %v511 = vshrl.u32 %v510, 5
    %v512 = vand.u32 %v510, 31
    %v513 = vsub.s32 32, %v512
    %v514 = vshrl.u32 683565275, %v513
    %v515 = vshll.u32 683565275, %v512
    %v516 = vshrl.u32 2475754826, %v513
    %v517 = vor.u32 %v515, %v516
    %v518 = vshll.u32 2475754826, %v512
    %v519 = vshrl.u32 2131351028, %v513
    %v520 = vor.u32 %v518, %v519
    %v521 = vshll.u32 2131351028, %v512
    %v522 = vshrl.u32 2102212464, %v513
    %v523 = vor.u32 %v521, %v522
    %v524 = vshll.u32 2102212464, %v512
    %v525 = vshrl.u32 920167782, %v513
    %v526 = vor.u32 %v524, %v525
    %v527 = vshll.u32 920167782, %v512
    %v528 = vshrl.u32 1326507024, %v513
    %v529 = vor.u32 %v527, %v528
    %vm530 = vcmp.lt.s32.totalorder %v511, 1
    %vm531 = vcmp.lt.s32.totalorder %v511, 2
    %vm532 = vcmp.lt.s32.totalorder %v511, 3
    %vm533 = vcmp.lt.s32.totalorder %v511, 4
    %v534 = vsel %vm530, %v514, %v517
    %v535 = vsel %vm533, %v523, 2102212464
    %v536 = vsel %vm532, %v520, %v535
    %v537 = vsel %vm531, %v534, %v536
    %v538 = vsel %vm530, %v517, %v520
    %v539 = vsel %vm533, %v526, 920167782
    %v540 = vsel %vm532, %v523, %v539
    %v541 = vsel %vm531, %v538, %v540
    %v542 = vsel %vm530, %v520, %v523
    %v543 = vsel %vm533, %v529, 1326507024
    %v544 = vsel %vm532, %v526, %v543
    %v545 = vsel %vm531, %v542, %v544
    %v546 = vshll.u32 %v506, 8
    %v547 = vmul.u32.u64.compose %v546, %v545
    %v548 = vextract.low.u32 %v547
    %v549 = vextract.high.u32 %v547
    %v550 = vmul.u32.u64.compose %v546, %v541
    %v551 = vextract.low.u32 %v550
    %v552 = vextract.high.u32 %v550
    %v553 = vmul.u32 %v546, %v537
    %v554 = vadd.s32 %v549, %v551
    %vm555 = vc.u32 %v549, %v551
    %v556 = vadd.s32 %v552, 1
    %v557 = vsel %vm555, %v556, %v552
    %v558 = vadd.s32 %v553, %v557
    %v559 = vadd.s32 %v558, 536870912
    %v560 = vshrl.u32 %v559, 30
    %v561 = vshll.u32 %v560, 30
    %v562 = vsub.s32 %v558, %v561
    %vm563 = vcmp.lt.s32.totalorder %v562, 0
    %v564 = vsub.s32 0, %v562
    %v565 = vsel %vm563, %v564, %v562
    %v566 = vclz %v565
    %v567 = vsub.s32 %v566, 2
    %vm568 = vcmp.gt.s32.totalorder 0, %v567
    %v569 = vsel %vm568, 0, %v567
    %v570 = vsub.s32 32, %v569
    %v571 = vshll.u32 %v562, %v569
    %v572 = vshrl.u32 %v554, %v570
    %v573 = vor.u32 %v571, %v572
    %v574 = vsub.s32 4294967266, %v569
    %v575 = vadd.s32 %v574, 127
    %v576 = vshll.u32 %v575, 23
    %v577 = vor.u32 4788187, %v576
    %v578 = vand.u32 2147483647, %v577
    %v580 = vcvt.s32.f32 %v573
    %v581 = vmul.f32 %v580, %v578
    %v582 = vxor.u32 %v581, 2147483648
    %v583 = vsel %vm500, %v582, %v581
    %v584 = vsub.s32 4, %v560
    %v585 = vsel %vm500, %v584, %v560
    %v586 = vsel %vm499, %v188, %v583
    %v587 = vsel %vm499, 0, %v585
    %v588 = vcosq.f32.pop %v586
    %v589 = vsinq.f32.pop %v586
    %vm590 = vweird.f32 %v188
    %v591 = vand.u32 %v587, 3
    %vm592 = vcmp.lt.s32.totalorder %v591, 2
    %vm593 = vcmp.eq.s32.totalorder %v591, 0
    %v594 = vxor.u32 %v589, 2147483648
    %v595 = vsel %vm593, %v588, %v594
    %vm596 = vcmp.eq.s32.totalorder %v591, 2
    %v597 = vxor.u32 %v588, 2147483648
    %v598 = vsel %vm596, %v597, %v589
    %v599 = vsel %vm592, %v595, %v598
    %v600 = vsel %vm590, nan, %v599
    %v601 = vmul.f32 %v163, %v291
    %v602 = vmul.f32 %v170, %v394
    %v603 = vmul.f32 %v177, %v497
    %v604 = vmul.f32 %v184, %v600
    %v605 = vand.u32 2147483647, %v185
    %vm606 = vcmp.le.f32.partialorder %v605, 0.7853982
    %vm607 = vcmp.lt.s32.totalorder %v185, 0
    %v608 = vand.u32 %v185, 2139095040
    %v609 = vshrl.u32 %v608, 23
    %v610 = vsub.s32 %v609, 127
    %v611 = vand.u32 2147483647, %v185
    %v612 = vand.u32 %v611, 8388607
    %v613 = vor.u32 %v612, 8388608
    %v614 = vsub.s32 0, %v613
    %v615 = vadd.s32 %v610, 1
    %vm616 = vcmp.gt.s32.totalorder %v615, 0
    %v617 = vsel %vm616, %v615, 0
    %v618 = vshrl.u32 %v617, 5
    %v619 = vand.u32 %v617, 31
    %v620 = vsub.s32 32, %v619
    %v621 = vshrl.u32 683565275, %v620
    %v622 = vshll.u32 683565275, %v619
    %v623 = vshrl.u32 2475754826, %v620
    %v624 = vor.u32 %v622, %v623
    %v625 = vshll.u32 2475754826, %v619
    %v626 = vshrl.u32 2131351028, %v620
    %v627 = vor.u32 %v625, %v626
    %v628 = vshll.u32 2131351028, %v619
    %v629 = vshrl.u32 2102212464, %v620
    %v630 = vor.u32 %v628, %v629
    %v631 = vshll.u32 2102212464, %v619
    %v632 = vshrl.u32 920167782, %v620
    %v633 = vor.u32 %v631, %v632
    %v634 = vshll.u32 920167782, %v619
    %v635 = vshrl.u32 1326507024, %v620
    %v636 = vor.u32 %v634, %v635
    %vm637 = vcmp.lt.s32.totalorder %v618, 1
    %vm638 = vcmp.lt.s32.totalorder %v618, 2
    %vm639 = vcmp.lt.s32.totalorder %v618, 3
    %vm640 = vcmp.lt.s32.totalorder %v618, 4
    %v641 = vsel %vm637, %v621, %v624
    %v642 = vsel %vm640, %v630, 2102212464
    %v643 = vsel %vm639, %v627, %v642
    %v644 = vsel %vm638, %v641, %v643
    %v645 = vsel %vm637, %v624, %v627
    %v646 = vsel %vm640, %v633, 920167782
    %v647 = vsel %vm639, %v630, %v646
    %v648 = vsel %vm638, %v645, %v647
    %v649 = vsel %vm637, %v627, %v630
    %v650 = vsel %vm640, %v636, 1326507024
    %v651 = vsel %vm639, %v633, %v650
    %v652 = vsel %vm638, %v649, %v651
    %v653 = vshll.u32 %v613, 8
    %v654 = vmul.u32.u64.compose %v653, %v652
    %v655 = vextract.low.u32 %v654
    %v656 = vextract.high.u32 %v654
    %v657 = vmul.u32.u64.compose %v653, %v648
    %v658 = vextract.low.u32 %v657
    %v659 = vextract.high.u32 %v657
    %v660 = vmul.u32 %v653, %v644
    %v661 = vadd.s32 %v656, %v658
    %vm662 = vc.u32 %v656, %v658
    %v663 = vadd.s32 %v659, 1
    %v664 = vsel %vm662, %v663, %v659
    %v665 = vadd.s32 %v660, %v664
    %v666 = vadd.s32 %v665, 536870912
    %v667 = vshrl.u32 %v666, 30
    %v668 = vshll.u32 %v667, 30
    %v669 = vsub.s32 %v665, %v668
    %vm670 = vcmp.lt.s32.totalorder %v669, 0
    %v671 = vsub.s32 0, %v669
    %v672 = vsel %vm670, %v671, %v669
    %v673 = vclz %v672
    %v674 = vsub.s32 %v673, 2
    %vm675 = vcmp.gt.s32.totalorder 0, %v674
    %v676 = vsel %vm675, 0, %v674
    %v677 = vsub.s32 32, %v676
    %v678 = vshll.u32 %v669, %v676
    %v679 = vshrl.u32 %v661, %v677
    %v680 = vor.u32 %v678, %v679
    %v681 = vsub.s32 4294967266, %v676
    %v682 = vadd.s32 %v681, 127
    %v683 = vshll.u32 %v682, 23
    %v684 = vor.u32 4788187, %v683
    %v685 = vand.u32 2147483647, %v684
    %v687 = vcvt.s32.f32 %v680
    %v688 = vmul.f32 %v687, %v685
    %v689 = vxor.u32 %v688, 2147483648
    %v690 = vsel %vm607, %v689, %v688
    %v691 = vsub.s32 4, %v667
    %v692 = vsel %vm607, %v691, %v667
    %v693 = vsel %vm606, %v185, %v690
    %v694 = vsel %vm606, 0, %v692
    %v695 = vcosq.f32.pop %v693
    %v696 = vsinq.f32.pop %v693
    %vm697 = vweird.f32 %v185
    %v698 = vadd.s32 %v694, 3
    %v699 = vand.u32 %v698, 3
    %vm700 = vcmp.lt.s32.totalorder %v699, 2
    %vm701 = vcmp.eq.s32.totalorder %v699, 0
    %v702 = vxor.u32 %v696, 2147483648
    %v703 = vsel %vm701, %v695, %v702
    %vm704 = vcmp.eq.s32.totalorder %v699, 2
    %v705 = vxor.u32 %v695, 2147483648
    %v706 = vsel %vm704, %v705, %v696
    %v707 = vsel %vm700, %v703, %v706
    %v708 = vsel %vm697, nan, %v707
    %v709 = vand.u32 2147483647, %v186
    %vm710 = vcmp.le.f32.partialorder %v709, 0.7853982
    %vm711 = vcmp.lt.s32.totalorder %v186, 0
    %v712 = vand.u32 %v186, 2139095040
    %v713 = vshrl.u32 %v712, 23
    %v714 = vsub.s32 %v713, 127
    %v715 = vand.u32 2147483647, %v186
    %v716 = vand.u32 %v715, 8388607
    %v717 = vor.u32 %v716, 8388608
    %v718 = vsub.s32 0, %v717
    %v719 = vadd.s32 %v714, 1
    %vm720 = vcmp.gt.s32.totalorder %v719, 0
    %v721 = vsel %vm720, %v719, 0
    %v722 = vshrl.u32 %v721, 5
    %v723 = vand.u32 %v721, 31
    %v724 = vsub.s32 32, %v723
    %v725 = vshrl.u32 683565275, %v724
    %v726 = vshll.u32 683565275, %v723
    %v727 = vshrl.u32 2475754826, %v724
    %v728 = vor.u32 %v726, %v727
    %v729 = vshll.u32 2475754826, %v723
    %v730 = vshrl.u32 2131351028, %v724
    %v731 = vor.u32 %v729, %v730
    %v732 = vshll.u32 2131351028, %v723
    %v733 = vshrl.u32 2102212464, %v724
    %v734 = vor.u32 %v732, %v733
    %v735 = vshll.u32 2102212464, %v723
    %v736 = vshrl.u32 920167782, %v724
    %v737 = vor.u32 %v735, %v736
    %v738 = vshll.u32 920167782, %v723
    %v739 = vshrl.u32 1326507024, %v724
    %v740 = vor.u32 %v738, %v739
    %vm741 = vcmp.lt.s32.totalorder %v722, 1
    %vm742 = vcmp.lt.s32.totalorder %v722, 2
    %vm743 = vcmp.lt.s32.totalorder %v722, 3
    %vm744 = vcmp.lt.s32.totalorder %v722, 4
    %v745 = vsel %vm741, %v725, %v728
    %v746 = vsel %vm744, %v734, 2102212464
    %v747 = vsel %vm743, %v731, %v746
    %v748 = vsel %vm742, %v745, %v747
    %v749 = vsel %vm741, %v728, %v731
    %v750 = vsel %vm744, %v737, 920167782
    %v751 = vsel %vm743, %v734, %v750
    %v752 = vsel %vm742, %v749, %v751
    %v753 = vsel %vm741, %v731, %v734
    %v754 = vsel %vm744, %v740, 1326507024
    %v755 = vsel %vm743, %v737, %v754
    %v756 = vsel %vm742, %v753, %v755
    %v757 = vshll.u32 %v717, 8
    %v758 = vmul.u32.u64.compose %v757, %v756
    %v759 = vextract.low.u32 %v758
    %v760 = vextract.high.u32 %v758
    %v761 = vmul.u32.u64.compose %v757, %v752
    %v762 = vextract.low.u32 %v761
    %v763 = vextract.high.u32 %v761
    %v764 = vmul.u32 %v757, %v748
    %v765 = vadd.s32 %v760, %v762
    %vm766 = vc.u32 %v760, %v762
    %v767 = vadd.s32 %v763, 1
    %v768 = vsel %vm766, %v767, %v763
    %v769 = vadd.s32 %v764, %v768
    %v770 = vadd.s32 %v769, 536870912
    %v771 = vshrl.u32 %v770, 30
    %v772 = vshll.u32 %v771, 30
    %v773 = vsub.s32 %v769, %v772
    %vm774 = vcmp.lt.s32.totalorder %v773, 0
    %v775 = vsub.s32 0, %v773
    %v776 = vsel %vm774, %v775, %v773
    %v777 = vclz %v776
    %v778 = vsub.s32 %v777, 2
    %vm779 = vcmp.gt.s32.totalorder 0, %v778
    %v780 = vsel %vm779, 0, %v778
    %v781 = vsub.s32 32, %v780
    %v782 = vshll.u32 %v773, %v780
    %v783 = vshrl.u32 %v765, %v781
    %v784 = vor.u32 %v782, %v783
    %v785 = vsub.s32 4294967266, %v780
    %v786 = vadd.s32 %v785, 127
    %v787 = vshll.u32 %v786, 23
    %v788 = vor.u32 4788187, %v787
    %v789 = vand.u32 2147483647, %v788
    %v791 = vcvt.s32.f32 %v784
    %v792 = vmul.f32 %v791, %v789
    %v793 = vxor.u32 %v792, 2147483648
    %v794 = vsel %vm711, %v793, %v792
    %v795 = vsub.s32 4, %v771
    %v796 = vsel %vm711, %v795, %v771
    %v797 = vsel %vm710, %v186, %v794
    %v798 = vsel %vm710, 0, %v796
    %v799 = vcosq.f32.pop %v797
    %v800 = vsinq.f32.pop %v797
    %vm801 = vweird.f32 %v186
    %v802 = vadd.s32 %v798, 3
    %v803 = vand.u32 %v802, 3
    %vm804 = vcmp.lt.s32.totalorder %v803, 2
    %vm805 = vcmp.eq.s32.totalorder %v803, 0
    %v806 = vxor.u32 %v800, 2147483648
    %v807 = vsel %vm805, %v799, %v806
    %vm808 = vcmp.eq.s32.totalorder %v803, 2
    %v809 = vxor.u32 %v799, 2147483648
    %v810 = vsel %vm808, %v809, %v800
    %v811 = vsel %vm804, %v807, %v810
    %v812 = vsel %vm801, nan, %v811
    %v813 = vand.u32 2147483647, %v187
    %vm814 = vcmp.le.f32.partialorder %v813, 0.7853982
    %vm815 = vcmp.lt.s32.totalorder %v187, 0
    %v816 = vand.u32 %v187, 2139095040
    %v817 = vshrl.u32 %v816, 23
    %v818 = vsub.s32 %v817, 127
    %v819 = vand.u32 2147483647, %v187
    %v820 = vand.u32 %v819, 8388607
    %v821 = vor.u32 %v820, 8388608
    %v822 = vsub.s32 0, %v821
    %v823 = vadd.s32 %v818, 1
    %vm824 = vcmp.gt.s32.totalorder %v823, 0
    %v825 = vsel %vm824, %v823, 0
    %v826 = vshrl.u32 %v825, 5
    %v827 = vand.u32 %v825, 31
    %v828 = vsub.s32 32, %v827
    %v829 = vshrl.u32 683565275, %v828
    %v830 = vshll.u32 683565275, %v827
    %v831 = vshrl.u32 2475754826, %v828
    %v832 = vor.u32 %v830, %v831
    %v833 = vshll.u32 2475754826, %v827
    %v834 = vshrl.u32 2131351028, %v828
    %v835 = vor.u32 %v833, %v834
    %v836 = vshll.u32 2131351028, %v827
    %v837 = vshrl.u32 2102212464, %v828
    %v838 = vor.u32 %v836, %v837
    %v839 = vshll.u32 2102212464, %v827
    %v840 = vshrl.u32 920167782, %v828
    %v841 = vor.u32 %v839, %v840
    %v842 = vshll.u32 920167782, %v827
    %v843 = vshrl.u32 1326507024, %v828
    %v844 = vor.u32 %v842, %v843
    %vm845 = vcmp.lt.s32.totalorder %v826, 1
    %vm846 = vcmp.lt.s32.totalorder %v826, 2
    %vm847 = vcmp.lt.s32.totalorder %v826, 3
    %vm848 = vcmp.lt.s32.totalorder %v826, 4
    %v849 = vsel %vm845, %v829, %v832
    %v850 = vsel %vm848, %v838, 2102212464
    %v851 = vsel %vm847, %v835, %v850
    %v852 = vsel %vm846, %v849, %v851
    %v853 = vsel %vm845, %v832, %v835
    %v854 = vsel %vm848, %v841, 920167782
    %v855 = vsel %vm847, %v838, %v854
    %v856 = vsel %vm846, %v853, %v855
    %v857 = vsel %vm845, %v835, %v838
    %v858 = vsel %vm848, %v844, 1326507024
    %v859 = vsel %vm847, %v841, %v858
    %v860 = vsel %vm846, %v857, %v859
    %v861 = vshll.u32 %v821, 8
    %v862 = vmul.u32.u64.compose %v861, %v860
    %v863 = vextract.low.u32 %v862
    %v864 = vextract.high.u32 %v862
    %v865 = vmul.u32.u64.compose %v861, %v856
    %v866 = vextract.low.u32 %v865
    %v867 = vextract.high.u32 %v865
    %v868 = vmul.u32 %v861, %v852
    %v869 = vadd.s32 %v864, %v866
    %vm870 = vc.u32 %v864, %v866
    %v871 = vadd.s32 %v867, 1
    %v872 = vsel %vm870, %v871, %v867
    %v873 = vadd.s32 %v868, %v872
    %v874 = vadd.s32 %v873, 536870912
    %v875 = vshrl.u32 %v874, 30
    %v876 = vshll.u32 %v875, 30
    %v877 = vsub.s32 %v873, %v876
    %vm878 = vcmp.lt.s32.totalorder %v877, 0
    %v879 = vsub.s32 0, %v877
    %v880 = vsel %vm878, %v879, %v877
    %v881 = vclz %v880
    %v882 = vsub.s32 %v881, 2
    %vm883 = vcmp.gt.s32.totalorder 0, %v882
    %v884 = vsel %vm883, 0, %v882
    %v885 = vsub.s32 32, %v884
    %v886 = vshll.u32 %v877, %v884
    %v887 = vshrl.u32 %v869, %v885
    %v888 = vor.u32 %v886, %v887
    %v889 = vsub.s32 4294967266, %v884
    %v890 = vadd.s32 %v889, 127
    %v891 = vshll.u32 %v890, 23
    %v892 = vor.u32 4788187, %v891
    %v893 = vand.u32 2147483647, %v892
    %v895 = vcvt.s32.f32 %v888
    %v896 = vmul.f32 %v895, %v893
    %v897 = vxor.u32 %v896, 2147483648
    %v898 = vsel %vm815, %v897, %v896
    %v899 = vsub.s32 4, %v875
    %v900 = vsel %vm815, %v899, %v875
    %v901 = vsel %vm814, %v187, %v898
    %v902 = vsel %vm814, 0, %v900
    %v903 = vcosq.f32.pop %v901
    %v904 = vsinq.f32.pop %v901
    %vm905 = vweird.f32 %v187
    %v906 = vadd.s32 %v902, 3
    %v907 = vand.u32 %v906, 3
    %vm908 = vcmp.lt.s32.totalorder %v907, 2
    %vm909 = vcmp.eq.s32.totalorder %v907, 0
    %v910 = vxor.u32 %v904, 2147483648
    %v911 = vsel %vm909, %v903, %v910
    %vm912 = vcmp.eq.s32.totalorder %v907, 2
    %v913 = vxor.u32 %v903, 2147483648
    %v914 = vsel %vm912, %v913, %v904
    %v915 = vsel %vm908, %v911, %v914
    %v916 = vsel %vm905, nan, %v915
    %v917 = vand.u32 2147483647, %v188
    %vm918 = vcmp.le.f32.partialorder %v917, 0.7853982
    %vm919 = vcmp.lt.s32.totalorder %v188, 0
    %v920 = vand.u32 %v188, 2139095040
    %v921 = vshrl.u32 %v920, 23
    %v922 = vsub.s32 %v921, 127
    %v923 = vand.u32 2147483647, %v188
    %v924 = vand.u32 %v923, 8388607
    %v925 = vor.u32 %v924, 8388608
    %v926 = vsub.s32 0, %v925
    %v927 = vadd.s32 %v922, 1
    %vm928 = vcmp.gt.s32.totalorder %v927, 0
    %v929 = vsel %vm928, %v927, 0
    %v930 = vshrl.u32 %v929, 5
    %v931 = vand.u32 %v929, 31
    %v932 = vsub.s32 32, %v931
    %v933 = vshrl.u32 683565275, %v932
    %v934 = vshll.u32 683565275, %v931
    %v935 = vshrl.u32 2475754826, %v932
    %v936 = vor.u32 %v934, %v935
    %v937 = vshll.u32 2475754826, %v931
    %v938 = vshrl.u32 2131351028, %v932
    %v939 = vor.u32 %v937, %v938
    %v940 = vshll.u32 2131351028, %v931
    %v941 = vshrl.u32 2102212464, %v932
    %v942 = vor.u32 %v940, %v941
    %v943 = vshll.u32 2102212464, %v931
    %v944 = vshrl.u32 920167782, %v932
    %v945 = vor.u32 %v943, %v944
    %v946 = vshll.u32 920167782, %v931
    %v947 = vshrl.u32 1326507024, %v932
    %v948 = vor.u32 %v946, %v947
    %vm949 = vcmp.lt.s32.totalorder %v930, 1
    %vm950 = vcmp.lt.s32.totalorder %v930, 2
    %vm951 = vcmp.lt.s32.totalorder %v930, 3
    %vm952 = vcmp.lt.s32.totalorder %v930, 4
    %v953 = vsel %vm949, %v933, %v936
    %v954 = vsel %vm952, %v942, 2102212464
    %v955 = vsel %vm951, %v939, %v954
    %v956 = vsel %vm950, %v953, %v955
    %v957 = vsel %vm949, %v936, %v939
    %v958 = vsel %vm952, %v945, 920167782
    %v959 = vsel %vm951, %v942, %v958
    %v960 = vsel %vm950, %v957, %v959
    %v961 = vsel %vm949, %v939, %v942
    %v962 = vsel %vm952, %v948, 1326507024
    %v963 = vsel %vm951, %v945, %v962
    %v964 = vsel %vm950, %v961, %v963
    %v965 = vshll.u32 %v925, 8
    %v966 = vmul.u32.u64.compose %v965, %v964
    %v967 = vextract.low.u32 %v966
    %v968 = vextract.high.u32 %v966
    %v969 = vmul.u32.u64.compose %v965, %v960
    %v970 = vextract.low.u32 %v969
    %v971 = vextract.high.u32 %v969
    %v972 = vmul.u32 %v965, %v956
    %v973 = vadd.s32 %v968, %v970
    %vm974 = vc.u32 %v968, %v970
    %v975 = vadd.s32 %v971, 1
    %v976 = vsel %vm974, %v975, %v971
    %v977 = vadd.s32 %v972, %v976
    %v978 = vadd.s32 %v977, 536870912
    %v979 = vshrl.u32 %v978, 30
    %v980 = vshll.u32 %v979, 30
    %v981 = vsub.s32 %v977, %v980
    %vm982 = vcmp.lt.s32.totalorder %v981, 0
    %v983 = vsub.s32 0, %v981
    %v984 = vsel %vm982, %v983, %v981
    %v985 = vclz %v984
    %v986 = vsub.s32 %v985, 2
    %vm987 = vcmp.gt.s32.totalorder 0, %v986
    %v988 = vsel %vm987, 0, %v986
    %v989 = vsub.s32 32, %v988
    %v990 = vshll.u32 %v981, %v988
    %v991 = vshrl.u32 %v973, %v989
    %v992 = vor.u32 %v990, %v991
    %v993 = vsub.s32 4294967266, %v988
    %v994 = vadd.s32 %v993, 127
    %v995 = vshll.u32 %v994, 23
    %v996 = vor.u32 4788187, %v995
    %v997 = vand.u32 2147483647, %v996
    %v999 = vcvt.s32.f32 %v992
    %v1000 = vmul.f32 %v999, %v997
    %v1001 = vxor.u32 %v1000, 2147483648
    %v1002 = vsel %vm919, %v1001, %v1000
    %v1003 = vsub.s32 4, %v979
    %v1004 = vsel %vm919, %v1003, %v979
    %v1005 = vsel %vm918, %v188, %v1002
    %v1006 = vsel %vm918, 0, %v1004
    %v1007 = vcosq.f32.pop %v1005
    %v1008 = vsinq.f32.pop %v1005
    %vm1009 = vweird.f32 %v188
    %v1010 = vadd.s32 %v1006, 3
    %v1011 = vand.u32 %v1010, 3
    %vm1012 = vcmp.lt.s32.totalorder %v1011, 2
    %vm1013 = vcmp.eq.s32.totalorder %v1011, 0
    %v1014 = vxor.u32 %v1008, 2147483648
    %v1015 = vsel %vm1013, %v1007, %v1014
    %vm1016 = vcmp.eq.s32.totalorder %v1011, 2
    %v1017 = vxor.u32 %v1007, 2147483648
    %v1018 = vsel %vm1016, %v1017, %v1008
    %v1019 = vsel %vm1012, %v1015, %v1018
    %v1020 = vsel %vm1009, nan, %v1019
    %v1021 = vmul.f32 %v163, %v708
    %v1022 = vmul.f32 %v170, %v812
    %v1023 = vmul.f32 %v177, %v916
    %v1024 = vmul.f32 %v184, %v1020
    %v1025 = vld [vmem:[#allocation4] sm:$0xff]
    %v1026 = vld [vmem:[#allocation4 + $0x8] sm:$0xff]
    %v1027 = vmul.f32 %v601, 0.1
    %v1028 = vmul.f32 %v602, 0.1
    %v1029 = vmul.f32 %v603, 0.1
    %v1030 = vmul.f32 %v604, 0.1
    %v1031 = vmul.f32 %v1021, 0.1
    %v1032 = vmul.f32 %v1022, 0.1
    %v1033 = vmul.f32 %v1023, 0.1
    %v1034 = vmul.f32 %v1024, 0.1
    %v1043 = vcombine.low %v1027, %v1028
    %v1044 = vcombine.low %v1029, %v1030
    %v1046 = vunpack.c.l.s4 1983009808
    %v1047 = vunpack.c.0.s8 %v1046
    %v1048 = vlaneseq
    %v1049 = vshrl.u32 %v1048, 7
    %v1050 = vsub.s32 %v1047, %v1049
    %v1051 = vrot.slane %v1043, %v1050
    %v1053 = vunpack.c.l.s4 1983009808
    %v1054 = vunpack.c.0.s8 %v1053
    %v1055 = vlaneseq
    %v1056 = vshrl.u32 %v1055, 7
    %v1057 = vsub.s32 %v1054, %v1056
    %v1058 = vrot.slane %v1044, %v1057
    %v1059 = vcombine.low %v1051, %v1058
    %v1060 = vcombine.low %v1031, %v1032
    %v1061 = vcombine.low %v1033, %v1034
    %v1063 = vunpack.c.l.s4 1983009808
    %v1064 = vunpack.c.0.s8 %v1063
    %v1065 = vlaneseq
    %v1066 = vshrl.u32 %v1065, 7
    %v1067 = vsub.s32 %v1064, %v1066
    %v1068 = vrot.slane %v1060, %v1067
    %v1070 = vunpack.c.l.s4 1983009808
    %v1071 = vunpack.c.0.s8 %v1070
    %v1072 = vlaneseq
    %v1073 = vshrl.u32 %v1072, 7
    %v1074 = vsub.s32 %v1071, %v1073
    %v1075 = vrot.slane %v1061, %v1074
    %v1076 = vcombine.low %v1068, %v1075
    %v1079 = vadd.f32 %v1025, %v1059
    %v1080 = vadd.f32 %v1026, %v1076
    %1081 = vst [vmem:[#allocation7] sm:$0xff] %v1079
    %1082 = vst [vmem:[#allocation7 + $0x8] sm:$0xff] %v1080
    // Predicated region
    $region10: #{tpu_custom_call.1} parent=1 // pred_check
      _
    $region11: #{tpu_custom_call.1} parent=1 // pred_check_branch
      %1084 = sbr.rel (0) target = $region13
    $region12: #{tpu_custom_call.1} parent=1 // pred_region
      %s1086 = ssub.s32 256, 256
      %1087 = vsyncadd [#allocation6], %s1086
      %s1089 = sshll.u32 [#allocation7], 4
      %s1090 = int_to_ptr.vmem [resolvable:$true] %s1089
      %1092 = dma.vmem_to_hbm [thread:$0]  %s1090, 256, %s2, [#allocation6]
    $region13: #{tpu_custom_call.1} parent=1 // pred_fallthru
      _
    // Predicated region
    $region14: #{tpu_custom_call.1} parent=1 // pred_check
      _
    $region15: #{tpu_custom_call.1} parent=1 // pred_check_branch
      %1094 = sbr.rel (0) target = $region17
    $region16: #{tpu_custom_call.1} parent=1 // pred_region
      %1095 = dma.done [#allocation6], 256
    $region17: #{tpu_custom_call.1} parent=1 // pred_fallthru
      _
    %1096 = vsyncpa [#allocation5], 1
    %1097 = vsyncpa [#allocation6], 1

</llo_original>
